<compile_context>
chip_gen: v7x
topology: tpu7x:2x2x1
jax: 0.10.0
libtpu: 0.0.40
codegen_flags: <defaults>
</compile_context>

<pallas_src>
import jax
import jax.numpy as jnp
from jax.experimental import pallas as pl
from jax.experimental.pallas import tpu as pltpu

_LANES = 128
_SUBLANES = 8                        # chunk boundaries kept 8-row aligned
_MIN_COPY_ROWS = 8                   # smallest bucketed copy (4 KiB of f32 @ 128 lanes)
_DMA_SPLIT_BYTES = 4 * 1024 * 1024   # split copies bigger than this
_MAX_DMA_CHUNKS = 4                  # max concurrent DMAs per copy


def _ceil_to(x: int, m: int) -> int:
    return ((x + m - 1) // m) * m


def _ceil_div(a: int, b: int) -> int:
    return -(-a // b)


def _next_pow2(x: int) -> int:
    return 1 << (max(1, x) - 1).bit_length()


def _chunk_bounds(rows: int, row_bytes: int):
    """Static (start_row, n_rows) chunks; >1 chunk only for multi-MiB copies."""
    total_bytes = rows * row_bytes
    n = max(1, min(_MAX_DMA_CHUNKS, _ceil_div(total_bytes, _DMA_SPLIT_BYTES)))
    if n == 1:
        return ((0, rows),)
    per = _ceil_to(_ceil_div(rows, n), _SUBLANES)
    bounds, r = [], 0
    while r < rows:
        nr = min(per, rows - r)
        bounds.append((r, nr))
        r += nr
    return tuple(bounds)


def _make_prefix_copy_kernel(bounds):
    """Copy the first sum(n_rows) rows of src to out via concurrent HBM->HBM DMAs."""
    def kernel(src_ref, out_ref, sems):
        copies = []
        for i, (r0, nr) in enumerate(bounds):
            cp = pltpu.make_async_copy(
                src_ref.at[pl.ds(r0, nr), :],
                out_ref.at[pl.ds(r0, nr), :],
                sems.at[i],
            )
            cp.start()
            copies.append(cp)
        for cp in copies:        # wait after all starts so the DMAs overlap
            cp.wait()
    return kernel


def _prefix_rows_copy(src2d: jax.Array, rows_copy: int) -> jax.Array:
    """Return src2d[:rows_copy, :] via direct HBM->HBM DMA (no VMEM staging)."""
    rows_total, cols = src2d.shape
    assert 0 < rows_copy <= rows_total
    bounds = _chunk_bounds(rows_copy, cols * src2d.dtype.itemsize)
    return pl.pallas_call(
        _make_prefix_copy_kernel(bounds),
        out_shape=jax.ShapeDtypeStruct((rows_copy, cols), src2d.dtype),
        in_specs=[pl.BlockSpec(memory_space=pl.ANY)],   # raw HBM ref, no auto-DMA
        out_specs=pl.BlockSpec(memory_space=pl.ANY),    # written only via DMA
        scratch_shapes=[pltpu.SemaphoreType.DMA((len(bounds),))],
        compiler_params=pltpu.CompilerParams(has_side_effects=True),
    )(src2d)


def learnable_positional_embedding(pe: jax.Array, seq_len: int) -> jax.Array:
    """Return pe[:, :seq_len, :] (pe is (1, max_len, d_model)) via a Pallas DMA copy."""
    _, max_len, d_model = pe.shape
    assert 0 < seq_len <= max_len

    total_elems = max_len * d_model
    slice_elems = seq_len * d_model

    if total_elems % _LANES == 0:
        # Lane-dense flat path (handles ragged seq_len too): view the table as
        # (rows, 128) contiguously and copy a bucketed row prefix.
        total_rows = total_elems // _LANES
        rows_needed = _ceil_div(slice_elems, _LANES)
        rows_copy = min(max(_MIN_COPY_ROWS, _next_pow2(rows_needed)), total_rows)
        out2d = _prefix_rows_copy(pe.reshape(total_rows, _LANES), rows_copy)
        # Tail trim + reshape are cheap XLA ops, fused into the consumer.
        return out2d.reshape(-1)[:slice_elems].reshape(1, seq_len, d_model)

    # Rare case: table size not divisible by 128 lanes. Same row-prefix DMA on
    # the native (max_len, d_model) view — still no VMEM, no masked stores.
    rows_copy = min(max(_MIN_COPY_ROWS, _next_pow2(seq_len)), max_len)
    out2d = _prefix_rows_copy(pe.reshape(max_len, d_model), rows_copy)
    return out2d[:seq_len].reshape(1, seq_len, d_model)


# ----------------------------------------------------------------------------
# Optional fused consumer (review item 1): y = x + pe[:, :seq, :].
# Not used by forward() (which must return the slice), but provided for callers
# that can consume the fused form — it removes a full write+read of the slab.
# ----------------------------------------------------------------------------
def _make_fused_add_kernel(seq_len: int):
    def kernel(x_ref, pe_ref, o_ref):
        o_ref[...] = (x_ref[...] + pe_ref[:, :seq_len, :]).astype(o_ref.dtype)
    return kernel


def add_positional_embedding(x: jax.Array, pe: jax.Array) -> jax.Array:
    batch, seq_len, d_model = x.shape
    _, max_len, pe_d = pe.shape
    assert pe_d == d_model and 0 < seq_len <= max_len
    # pe block's second-minor dim must be a multiple of 8 (or the full dim);
    # x/out blocks use their full (seq, d_model) dims so the rule is satisfied.
    seq_block = min(_ceil_to(seq_len, _SUBLANES), max_len)
    # TODO(synk): tile the seq axis for very long sequences instead of one
    # (1, seq, d_model) block per batch element.
    return pl.pallas_call(
        _make_fused_add_kernel(seq_len),
        out_shape=jax.ShapeDtypeStruct((batch, seq_len, d_model), x.dtype),
        grid=(batch,),
        in_specs=[
            pl.BlockSpec((1, seq_len, d_model), lambda b: (b, 0, 0)),
            pl.BlockSpec((1, seq_block, d_model), lambda b: (0, 0, 0)),
        ],
        out_specs=pl.BlockSpec((1, seq_len, d_model), lambda b: (b, 0, 0)),
        compiler_params=pltpu.CompilerParams(
            dimension_semantics=("parallel",),        # batch axis -> megacore
            vmem_limit_bytes=32 * 1024 * 1024,        # safe on v5e/v6e/v7x
        ),
    )(x, pe)


class LearnablePositionalEmbeddingPallas:
    """Mirror of the PyTorch module, parameters initialized in-script."""

    def __init__(self, d_model: int, max_len: int = 512, key=None):
        if key is None:
            key = jax.random.PRNGKey(0)
        pe = 0.1 * jax.random.normal(key, (max_len, d_model), dtype=jnp.float32)
        self.weight = pe[None, :, :]          # (1, max_len, d_model)

    def __call__(self, x: jax.Array) -> jax.Array:
        # x: (batch, seq, feature); only its seq length is used.
        # Output is (1, seq, d_model), exactly like the PyTorch module.
        return learnable_positional_embedding(self.weight, x.shape[1])


if __name__ == "__main__":
    key = jax.random.PRNGKey(0)
    k_w, k_x = jax.random.split(key)

    d_model, max_len = 32, 512
    batch, seq = 2, 8

    module = LearnablePositionalEmbeddingPallas(d_model, max_len=max_len, key=k_w)
    x = jax.random.normal(k_x, (batch, seq, d_model), dtype=jnp.float32)

    # Module-faithful forward: pe[:, :seq, :] via a single HBM->HBM DMA.
    out = jax.block_until_ready(module(x))
    ref = module.weight[:, :seq, :]
    assert out.shape == (1, seq, d_model), out.shape
    assert jnp.allclose(out, ref), "mismatch vs reference slice (flat path)"

    # Ragged seq_len: still the lane-dense flat path, tail trimmed in wrapper.
    seq_ragged = 7
    out_r = jax.block_until_ready(
        learnable_positional_embedding(module.weight, seq_ragged))
    assert out_r.shape == (1, seq_ragged, d_model), out_r.shape
    assert jnp.allclose(out_r, module.weight[:, :seq_ragged, :]), \
        "mismatch vs reference slice (ragged path)"

    # Optional fused consumer: x + pe[:, :seq, :] in one kernel.
    fused = jax.block_until_ready(add_positional_embedding(x, module.weight))
    assert fused.shape == (batch, seq, d_model), fused.shape
    assert jnp.allclose(fused, x + ref), "mismatch vs reference fused add"

    print("KERNEL_OK")
</pallas_src>

<mosaic_0001>
module attributes {stable_mosaic.version = 11 : i64} {
  func.func @kernel(%arg0: memref<128x128xf32, #tpu.memory_space<any>>, %arg1: memref<8x128xf32, #tpu.memory_space<any>>, %arg2: memref<1x!tpu.dma_semaphore, #tpu.memory_space<semaphore_mem>>) attributes {dimension_semantics = [], scalar_prefetch = 0 : i64, scratch_operands = 1 : i64, tpu.core_type = #tpu.core_type<tc>} {
    %c0_i32 = arith.constant 0 : i32
    %c0_i32_0 = arith.constant 0 : i32
    %c0_i32_1 = arith.constant 0 : i32
    %0 = tpu.memref_slice %arg0[%c0_i32_0, %c0_i32_1] : memref<128x128xf32, #tpu.memory_space<any>> -> memref<8x128xf32, #tpu.memory_space<any>>
    %c0_i32_2 = arith.constant 0 : i32
    %c0_i32_3 = arith.constant 0 : i32
    %1 = tpu.memref_slice %arg1[%c0_i32_2, %c0_i32_3] : memref<8x128xf32, #tpu.memory_space<any>> -> memref<8x128xf32, #tpu.memory_space<any>>
    %2 = tpu.memref_slice %arg2[%c0_i32] : memref<1x!tpu.dma_semaphore, #tpu.memory_space<semaphore_mem>> -> memref<1x!tpu.dma_semaphore, #tpu.memory_space<semaphore_mem>>
    %3 = tpu.memref_squeeze %2 : memref<1x!tpu.dma_semaphore, #tpu.memory_space<semaphore_mem>> -> memref<!tpu.dma_semaphore, #tpu.memory_space<semaphore_mem>>
    tpu.enqueue_dma source(%0 : memref<8x128xf32, #tpu.memory_space<any>>) target(%1 : memref<8x128xf32, #tpu.memory_space<any>>) target_semaphore(%3 : memref<!tpu.dma_semaphore, #tpu.memory_space<semaphore_mem>>)
    %c0_i32_4 = arith.constant 0 : i32
    %c0_i32_5 = arith.constant 0 : i32
    %c0_i32_6 = arith.constant 0 : i32
    %4 = tpu.memref_slice %arg0[%c0_i32_5, %c0_i32_6] : memref<128x128xf32, #tpu.memory_space<any>> -> memref<8x128xf32, #tpu.memory_space<any>>
    %c0_i32_7 = arith.constant 0 : i32
    %c0_i32_8 = arith.constant 0 : i32
    %5 = tpu.memref_slice %arg1[%c0_i32_7, %c0_i32_8] : memref<8x128xf32, #tpu.memory_space<any>> -> memref<8x128xf32, #tpu.memory_space<any>>
    %6 = tpu.memref_slice %arg2[%c0_i32_4] : memref<1x!tpu.dma_semaphore, #tpu.memory_space<semaphore_mem>> -> memref<1x!tpu.dma_semaphore, #tpu.memory_space<semaphore_mem>>
    %7 = tpu.memref_squeeze %6 : memref<1x!tpu.dma_semaphore, #tpu.memory_space<semaphore_mem>> -> memref<!tpu.dma_semaphore, #tpu.memory_space<semaphore_mem>>
    tpu.wait_dma2 semaphore(%7 : memref<!tpu.dma_semaphore, #tpu.memory_space<semaphore_mem>>) src(%4 : memref<8x128xf32, #tpu.memory_space<any>>) dst(%5 : memref<8x128xf32, #tpu.memory_space<any>>)
    return
  }
}

</mosaic_0001>

<llo_original>
// kernel: tpu_custom_call.1
$region0: #{tpu_custom_call.1}
  #allocation0 [shape = 'u32[]', space=smem, size = 0x4, offset = 0x4, fixed_abs, tag = 'smem constant byte address 0x4 - core index']
  #allocation1 [shape = 'u32[144,128]{1,0:T(1,128)}', space=vmem, size = 0x12000, scoped, tag = 'internal scratch']
  #allocation2 [shape = 's32[1]{0}', space=sflag, size = 0x4, scoped, tag = 'scratch operand']
  #allocation3 [shape = 's32[]', space=sflag, size = 0x4, offset = 0, fixed_abs, tag = 'sflag constant byte address 0x0 - dummy sync flag']
  #allocation4 [shape = 'u32[0]{0}', space=smem, size = 0, offset = 0, fixed_abs, tag = 'smem constant byte address 0x0 - null']
  %s0 = inlined_call_operand.hbm [shape: f32[128,128], index: 0, kind: input, shape index: {}]
  %s1 = inlined_call_operand.hbm [shape: f32[8,128], index: 1, kind: output, shape index: {}]
  %s2 = sld [smem:[#allocation0]]
  $region2: #{tpu_custom_call.1} parent=0
    _
  %s4 = ssub.s32 1, %s2
  %s5 = scalar_select 0, %s4, %s2
  %s7 = sshll.u32 1, 14
  %s8 = sxor.u32 4294967295, %s7
  %s11 = sshll.u32 3, 24
  %s12 = sxor.u32 4294967295, %s11
  %s13 = sand.u32 0, %s12
  %s15 = sor.u32 %s13, 0
  %18 = dma.general %s0, 128, %s1, [#allocation2], [#allocation3], [#allocation4], %s15, 0
  %s19 = smul.u32 8, 1
  %s20 = sshll.u32 %s19, 4
  %21 = dma.done [#allocation2], %s20
  %22 = vsyncmov [#allocation2]
  %s23 = vpop.sfrf %22
  %p24 = scmp.eq.s32.totalorder %s23, 0
  %p25 = pneg %p24
  %27 = shalt.err (%p25)

</llo_original>
